<compile_context>
chip_gen: v6e
topology: v6e:2x2x1
jax: 0.10.0
libtpu: 0.0.40
codegen_flags: <defaults>
</compile_context>

<pallas_src>
import functools

import numpy as np
import jax
import jax.numpy as jnp
from jax import lax
from jax.experimental import pallas as pl
from jax.experimental.pallas import tpu as pltpu

EPS = 1e-5  # PyTorch BatchNorm2d default eps


def _tap(r, d):
    # ConvTranspose2d(k=4, s=2, p=1): output row oh = 2*ih - 1 + kh.
    # For output parity r (oh = 2m + r) and coarse offset d (ih = m + d),
    # return the contributing kernel tap kh, or None if no tap exists.
    return {(0, 0): 1, (0, -1): 3, (1, 0): 2, (1, 1): 0}.get((r, d))


# ---------------------------------------------------------------------------
# Fused kernel.  Channels on sublanes, flattened (n, ho, wo) batch on lanes.
#   p1t  : (K*K*Cin, R) bf16   im2col patches; rows = (kh, kw, ci)
#   w1r  : (Cmid, K*K*Cin) bf16
#   bn1  : (Cmid, 2) f32        [:,0]=gamma1  [:,1]=beta1
#   w2f  : (4*Cout, 9*Cmid) bf16  rows = (rh, rw, co); cols = (tap, ci)
#   m8   : (8, R) f32           validity masks for the 8 non-center taps
#   bn2  : (4*Cout, 2) f32      [:,0]=gamma2  [:,1]=beta2 (per row)
#   out  : (4*Cout, R) f32      rows = (rh, rw, co), lanes = (n, m, l)
# ---------------------------------------------------------------------------
def _fused_kernel(p1t_ref, w1r_ref, bn1_ref, w2f_ref, m8_ref, bn2_ref, o_ref,
                  *, Wo, R, Cout):
    # ---- layer 1: Conv2d as a single GEMM (lane-dense, bias folded into BN) --
    y1 = jnp.dot(w1r_ref[...], p1t_ref[...],
                 preferred_element_type=jnp.float32)            # (Cmid, R) f32

    # ---- BN1: per-row (= per mid-channel) stats over all R lanes -----------
    inv_n1 = 1.0 / R
    mean1 = jnp.sum(y1, axis=1, keepdims=True) * inv_n1
    c1 = y1 - mean1
    var1 = jnp.sum(c1 * c1, axis=1, keepdims=True) * inv_n1      # biased var
    scale1 = bn1_ref[:, 0:1] * lax.rsqrt(var1 + EPS)
    y1n = c1 * scale1 + bn1_ref[:, 1:2]                          # (Cmid, R) f32

    # ---- layer 2: ConvTranspose2d(k=4,s=2,p=1) as ONE K-concatenated GEMM --
    # src_stack rows = (tap, ci); tap t shifts lanes by (dh*Wo + dw), masked
    # against image-row / image-column wraparound (masks are constants).
    parts = []
    mi = 0
    for dh in (-1, 0, 1):
        for dw in (-1, 0, 1):
            if dh == 0 and dw == 0:
                src = y1n
            else:
                shift = (-(Wo * dh + dw)) % R
                src = pltpu.roll(y1n, shift, 1) * m8_ref[mi:mi + 1, :]
                mi += 1
            parts.append(src.astype(jnp.bfloat16))
    src_stack = jnp.concatenate(parts, axis=0)                   # (9*Cmid, R) bf16
    out2 = jnp.dot(w2f_ref[...], src_stack,
                   preferred_element_type=jnp.float32)           # (4*Cout, R) f32

    # ---- BN2: channel co groups the 4 parity rows {co, Cout+co, ...} --------
    # Group combine = 3 static-sublane-slice adds; stats stay in f32 adds.
    inv_n2 = 1.0 / (4 * R)
    g4 = (out2[0 * Cout:1 * Cout] + out2[1 * Cout:2 * Cout] +
          out2[2 * Cout:3 * Cout] + out2[3 * Cout:4 * Cout])     # (Cout, R)
    mean2c = jnp.sum(g4, axis=1, keepdims=True) * inv_n2         # (Cout, 1)
    mean2 = jnp.concatenate([mean2c] * 4, axis=0)                # (4*Cout, 1)
    c2 = out2 - mean2
    sq = c2 * c2
    v4 = (sq[0 * Cout:1 * Cout] + sq[1 * Cout:2 * Cout] +
          sq[2 * Cout:3 * Cout] + sq[3 * Cout:4 * Cout])
    var2c = jnp.sum(v4, axis=1, keepdims=True) * inv_n2
    rstd2 = jnp.concatenate([lax.rsqrt(var2c + EPS)] * 4, axis=0)
    o_ref[...] = c2 * (bn2_ref[:, 0:1] * rstd2) + bn2_ref[:, 1:2]


# ---------------------------------------------------------------------------
# Full TestNet forward (spec_output=True path)
# ---------------------------------------------------------------------------
def testnet_forward(x, params):
    (w1, b1, g1, bt1, wt, b2, g2, bt2) = params
    del b1, b2  # conv biases cancel exactly against training-mode BN means
    N, Cin, H, W = x.shape
    K, S, P = 4, 2, 1                       # module defaults; parity split below
    assert (K, S, P) == (4, 2, 1)           # relies on K == 2*S, P == S - 1
    Cmid = w1.shape[0]
    Cout = wt.shape[1]
    Ho = (H + 2 * P - K) // S + 1
    Wo = (W + 2 * P - K) // S + 1
    R = N * Ho * Wo
    assert R % 128 == 0, "lane axis (n*ho*wo) must be a multiple of 128"
    nrows = 4 * Cout

    # ----- layer-1 im2col (bf16): rows = (kh, kw, ci), lanes = (n, ho, wo) ---
    xt = x.transpose(1, 0, 2, 3).astype(jnp.bfloat16)            # (Cin, N, H, W)
    xp = jnp.pad(xt, ((0, 0), (0, 0), (P, P), (P, P)))
    cols = [xp[:, :, kh:kh + S * Ho:S, kw:kw + S * Wo:S]
            for kh in range(K) for kw in range(K)]               # (Cin, N, Ho, Wo)
    p1t = jnp.stack(cols, axis=0).reshape(K * K * Cin, R)        # bf16

    # w1 columns must match p1t row order (kh, kw, ci)
    w1r = w1.transpose(0, 2, 3, 1).reshape(Cmid, K * K * Cin).astype(jnp.bfloat16)

    # ----- layer-2 per-tap parity weights, K-concatenated: (4*Cout, 9*Cmid) --
    mats = []
    for dh in (-1, 0, 1):
        for dw in (-1, 0, 1):
            m = jnp.zeros((2, 2, Cout, Cmid), jnp.float32)
            for rh in range(2):
                kh = _tap(rh, dh)
                if kh is None:
                    continue
                for rw in range(2):
                    kw = _tap(rw, dw)
                    if kw is None:
                        continue
                    m = m.at[rh, rw].set(wt[:, :, kh, kw].T)     # (Cout, Cmid)
            mats.append(m.reshape(nrows, Cmid))
    w2f = jnp.concatenate(mats, axis=1).astype(jnp.bfloat16)     # (nrows, 9*Cmid)

    # ----- tap validity masks (compile-time constants, 8 non-center taps) ----
    lane = np.arange(R)
    l_idx = lane % Wo
    m_idx = (lane // Wo) % Ho
    mrows = []
    for dh in (-1, 0, 1):
        for dw in (-1, 0, 1):
            if dh == 0 and dw == 0:
                continue
            valid = ((m_idx + dh >= 0) & (m_idx + dh < Ho) &
                     (l_idx + dw >= 0) & (l_idx + dw < Wo))
            mrows.append(valid.astype(np.float32))
    mask8 = jnp.asarray(np.stack(mrows, axis=0))                 # (8, R) f32

    # ----- packed BN params (per-row) ----------------------------------------
    bn1 = jnp.stack([g1, bt1], axis=1)                           # (Cmid, 2)
    bn2 = jnp.stack([jnp.tile(g2, 4), jnp.tile(bt2, 4)], axis=1)  # (nrows, 2)

    kernel = functools.partial(_fused_kernel, Wo=Wo, R=R, Cout=Cout)

    # Single invocation; whole arrays resident in VMEM (default BlockSpecs).
    outT = pl.pallas_call(
        kernel,
        out_shape=jax.ShapeDtypeStruct((nrows, R), jnp.float32),
    )(p1t, w1r, bn1, w2f, mask8, bn2)

    # depth-to-space: rows (rh, rw, co), lanes (n, m, l)  ->  NCHW
    out = outT.reshape(2, 2, Cout, N, Ho, Wo).transpose(3, 2, 4, 0, 5, 1)
    out = out.reshape(N, Cout, 2 * Ho, 2 * Wo)
    # TODO(synk): spec_output=False tail (icomplex_as_channel + ispectro /
    # inverse STFT with external HOP_LENGTH / FRAMES_PER_SAMPLE) has no clean
    # Pallas equivalent; this returns the spec_output=True result.
    return out


# ---------------------------------------------------------------------------
# Pure-JAX reference (XLA convs, f32 HIGHEST) for correctness check
# ---------------------------------------------------------------------------
def reference(x, params):
    (w1, b1, g1, bt1, wt, b2, g2, bt2) = params

    def bn(y, g, b):
        m = y.mean(axis=(0, 2, 3), keepdims=True)
        v = ((y - m) ** 2).mean(axis=(0, 2, 3), keepdims=True)
        return (y - m) * lax.rsqrt(v + EPS) * g[None, :, None, None] + b[None, :, None, None]

    y1 = lax.conv_general_dilated(
        x, w1, (2, 2), ((1, 1), (1, 1)),
        dimension_numbers=("NCHW", "OIHW", "NCHW"),
        precision=lax.Precision.HIGHEST,
    ) + b1[None, :, None, None]
    y1 = bn(y1, g1, bt1)

    w_eq = jnp.flip(wt, axis=(2, 3)).transpose(1, 0, 2, 3)
    y2 = lax.conv_general_dilated(
        y1, w_eq, (1, 1), ((2, 2), (2, 2)), lhs_dilation=(2, 2),
        dimension_numbers=("NCHW", "OIHW", "NCHW"),
        precision=lax.Precision.HIGHEST,
    ) + b2[None, :, None, None]
    return bn(y2, g2, bt2)


if __name__ == "__main__":
    key = jax.random.PRNGKey(0)
    ks = jax.random.split(key, 9)

    C = 48  # num_channels (default)
    # Conv2d(4, 48, 4, 2, 1): weight (O, I, kH, kW), bias (O,)
    w1 = 0.1 * jax.random.normal(ks[0], (C, 4, 4, 4), jnp.float32)
    b1 = 0.1 * jax.random.normal(ks[1], (C,), jnp.float32)
    # BatchNorm2d(48) affine params
    g1 = 1.0 + 0.1 * jax.random.normal(ks[2], (C,), jnp.float32)
    bt1 = 0.1 * jax.random.normal(ks[3], (C,), jnp.float32)
    # ConvTranspose2d(48, 4, 4, 2, 1): weight (I, O, kH, kW), bias (O,)
    wt = 0.1 * jax.random.normal(ks[4], (C, 4, 4, 4), jnp.float32)
    b2 = 0.1 * jax.random.normal(ks[5], (4,), jnp.float32)
    # BatchNorm2d(4) affine params
    g2 = 1.0 + 0.1 * jax.random.normal(ks[6], (4,), jnp.float32)
    bt2 = 0.1 * jax.random.normal(ks[7], (4,), jnp.float32)

    params = (w1, b1, g1, bt1, wt, b2, g2, bt2)

    # small input consistent with Conv2d(4, ...): N=2, C=4, H=W=16 (NCHW)
    x = jax.random.normal(ks[8], (2, 4, 16, 16), jnp.float32)

    out = jax.jit(testnet_forward)(x, params)
    out = jax.block_until_ready(out)

    ref = reference(x, params)
    assert out.shape == (2, 4, 16, 16), out.shape
    assert bool(jnp.all(jnp.isfinite(out)))
    # bf16 matmul operands (f32 accumulate / f32 BN stats) vs. f32-HIGHEST
    # reference: allow bf16-operand rounding noise (~1e-2 worst case).
    assert bool(jnp.allclose(out, ref, atol=4e-2, rtol=4e-2)), float(
        jnp.max(jnp.abs(out - ref))
    )
    print("KERNEL_OK")
</pallas_src>

<mosaic_0001>
module attributes {stable_mosaic.version = 11 : i64} {
  func.func @_fused_kernel(%arg0: memref<64x128xbf16, #tpu.memory_space<vmem>>, %arg1: memref<48x64xbf16, #tpu.memory_space<vmem>>, %arg2: memref<48x2xf32, #tpu.memory_space<vmem>>, %arg3: memref<16x432xbf16, #tpu.memory_space<vmem>>, %arg4: memref<8x128xf32, #tpu.memory_space<vmem>>, %arg5: memref<16x2xf32, #tpu.memory_space<vmem>>, %arg6: memref<16x128xf32, #tpu.memory_space<vmem>>) attributes {dimension_semantics = [], scalar_prefetch = 0 : i64, scratch_operands = 0 : i64, tpu.core_type = #tpu.core_type<tc>} {
    %c0 = arith.constant 0 : index
    %c0_0 = arith.constant 0 : index
    %0 = vector.load %arg1[%c0, %c0_0] : memref<48x64xbf16, #tpu.memory_space<vmem>>, vector<48x64xbf16>
    %c0_1 = arith.constant 0 : index
    %c0_2 = arith.constant 0 : index
    %1 = vector.load %arg0[%c0_1, %c0_2] : memref<64x128xbf16, #tpu.memory_space<vmem>>, vector<64x128xbf16>
    %cst = arith.constant dense<0.000000e+00> : vector<48x128xf32>
    %2 = tpu.matmul %0, %1, %cst {dimension_numbers = #tpu.dot_dimension_numbers<[1], [0], [0], [1], [0, 0, 1, 1], [], []>} : vector<48x64xbf16>, vector<64x128xbf16>, vector<48x128xf32> -> vector<48x128xf32>
    %cst_3 = arith.constant dense<0.000000e+00> : vector<48xf32>
    %3 = vector.multi_reduction <add>, %2, %cst_3 [1] : vector<48x128xf32> to vector<48xf32>
    %4 = vector.shape_cast %3 : vector<48xf32> to vector<48x1xf32>
    %cst_4 = arith.constant 7.812500e-03 : f32
    %5 = vector.broadcast %cst_4 : f32 to vector<48x1xf32>
    %6 = arith.mulf %4, %5 : vector<48x1xf32>
    %7 = vector.broadcast %6 : vector<48x1xf32> to vector<48x128xf32>
    %8 = arith.subf %2, %7 : vector<48x128xf32>
    %9 = arith.mulf %8, %8 : vector<48x128xf32>
    %cst_5 = arith.constant dense<0.000000e+00> : vector<48xf32>
    %10 = vector.multi_reduction <add>, %9, %cst_5 [1] : vector<48x128xf32> to vector<48xf32>
    %11 = vector.shape_cast %10 : vector<48xf32> to vector<48x1xf32>
    %cst_6 = arith.constant 7.812500e-03 : f32
    %12 = vector.broadcast %cst_6 : f32 to vector<48x1xf32>
    %13 = arith.mulf %11, %12 : vector<48x1xf32>
    %c0_7 = arith.constant 0 : index
    %c0_8 = arith.constant 0 : index
    %14 = vector.load %arg2[%c0_7, %c0_8] : memref<48x2xf32, #tpu.memory_space<vmem>>, vector<48x1xf32>
    %cst_9 = arith.constant 9.99999974E-6 : f32
    %15 = vector.broadcast %cst_9 : f32 to vector<48x1xf32>
    %16 = arith.addf %13, %15 : vector<48x1xf32>
    %17 = math.rsqrt %16 : vector<48x1xf32>
    %18 = arith.mulf %14, %17 : vector<48x1xf32>
    %19 = vector.broadcast %18 : vector<48x1xf32> to vector<48x128xf32>
    %20 = arith.mulf %8, %19 : vector<48x128xf32>
    %c0_10 = arith.constant 0 : index
    %c1 = arith.constant 1 : index
    %21 = vector.load %arg2[%c0_10, %c1] : memref<48x2xf32, #tpu.memory_space<vmem>>, vector<48x1xf32>
    %22 = vector.broadcast %21 : vector<48x1xf32> to vector<48x128xf32>
    %23 = arith.addf %20, %22 : vector<48x128xf32>
    %c9_i32 = arith.constant 9 : i32
    %24 = tpu.dynamic_rotate %23 by %c9_i32 dim 1 : vector<48x128xf32>, i32 -> vector<48x128xf32>
    %c0_11 = arith.constant 0 : index
    %c0_12 = arith.constant 0 : index
    %25 = vector.load %arg4[%c0_11, %c0_12] : memref<8x128xf32, #tpu.memory_space<vmem>>, vector<1x128xf32>
    %26 = vector.broadcast %25 : vector<1x128xf32> to vector<48x128xf32>
    %27 = arith.mulf %24, %26 : vector<48x128xf32>
    %28 = arith.truncf %27 : vector<48x128xf32> to vector<48x128xbf16>
    %c8_i32 = arith.constant 8 : i32
    %29 = tpu.dynamic_rotate %23 by %c8_i32 dim 1 : vector<48x128xf32>, i32 -> vector<48x128xf32>
    %c1_13 = arith.constant 1 : index
    %c0_14 = arith.constant 0 : index
    %30 = vector.load %arg4[%c1_13, %c0_14] : memref<8x128xf32, #tpu.memory_space<vmem>>, vector<1x128xf32>
    %31 = vector.broadcast %30 : vector<1x128xf32> to vector<48x128xf32>
    %32 = arith.mulf %29, %31 : vector<48x128xf32>
    %33 = arith.truncf %32 : vector<48x128xf32> to vector<48x128xbf16>
    %c7_i32 = arith.constant 7 : i32
    %34 = tpu.dynamic_rotate %23 by %c7_i32 dim 1 : vector<48x128xf32>, i32 -> vector<48x128xf32>
    %c2 = arith.constant 2 : index
    %c0_15 = arith.constant 0 : index
    %35 = vector.load %arg4[%c2, %c0_15] : memref<8x128xf32, #tpu.memory_space<vmem>>, vector<1x128xf32>
    %36 = vector.broadcast %35 : vector<1x128xf32> to vector<48x128xf32>
    %37 = arith.mulf %34, %36 : vector<48x128xf32>
    %38 = arith.truncf %37 : vector<48x128xf32> to vector<48x128xbf16>
    %c1_i32 = arith.constant 1 : i32
    %39 = tpu.dynamic_rotate %23 by %c1_i32 dim 1 : vector<48x128xf32>, i32 -> vector<48x128xf32>
    %c3 = arith.constant 3 : index
    %c0_16 = arith.constant 0 : index
    %40 = vector.load %arg4[%c3, %c0_16] : memref<8x128xf32, #tpu.memory_space<vmem>>, vector<1x128xf32>
    %41 = vector.broadcast %40 : vector<1x128xf32> to vector<48x128xf32>
    %42 = arith.mulf %39, %41 : vector<48x128xf32>
    %43 = arith.truncf %42 : vector<48x128xf32> to vector<48x128xbf16>
    %44 = arith.truncf %23 : vector<48x128xf32> to vector<48x128xbf16>
    %c127_i32 = arith.constant 127 : i32
    %45 = tpu.dynamic_rotate %23 by %c127_i32 dim 1 : vector<48x128xf32>, i32 -> vector<48x128xf32>
    %c4 = arith.constant 4 : index
    %c0_17 = arith.constant 0 : index
    %46 = vector.load %arg4[%c4, %c0_17] : memref<8x128xf32, #tpu.memory_space<vmem>>, vector<1x128xf32>
    %47 = vector.broadcast %46 : vector<1x128xf32> to vector<48x128xf32>
    %48 = arith.mulf %45, %47 : vector<48x128xf32>
    %49 = arith.truncf %48 : vector<48x128xf32> to vector<48x128xbf16>
    %c121_i32 = arith.constant 121 : i32
    %50 = tpu.dynamic_rotate %23 by %c121_i32 dim 1 : vector<48x128xf32>, i32 -> vector<48x128xf32>
    %c5 = arith.constant 5 : index
    %c0_18 = arith.constant 0 : index
    %51 = vector.load %arg4[%c5, %c0_18] : memref<8x128xf32, #tpu.memory_space<vmem>>, vector<1x128xf32>
    %52 = vector.broadcast %51 : vector<1x128xf32> to vector<48x128xf32>
    %53 = arith.mulf %50, %52 : vector<48x128xf32>
    %54 = arith.truncf %53 : vector<48x128xf32> to vector<48x128xbf16>
    %c120_i32 = arith.constant 120 : i32
    %55 = tpu.dynamic_rotate %23 by %c120_i32 dim 1 : vector<48x128xf32>, i32 -> vector<48x128xf32>
    %c6 = arith.constant 6 : index
    %c0_19 = arith.constant 0 : index
    %56 = vector.load %arg4[%c6, %c0_19] : memref<8x128xf32, #tpu.memory_space<vmem>>, vector<1x128xf32>
    %57 = vector.broadcast %56 : vector<1x128xf32> to vector<48x128xf32>
    %58 = arith.mulf %55, %57 : vector<48x128xf32>
    %59 = arith.truncf %58 : vector<48x128xf32> to vector<48x128xbf16>
    %c119_i32 = arith.constant 119 : i32
    %60 = tpu.dynamic_rotate %23 by %c119_i32 dim 1 : vector<48x128xf32>, i32 -> vector<48x128xf32>
    %c7 = arith.constant 7 : index
    %c0_20 = arith.constant 0 : index
    %61 = vector.load %arg4[%c7, %c0_20] : memref<8x128xf32, #tpu.memory_space<vmem>>, vector<1x128xf32>
    %62 = vector.broadcast %61 : vector<1x128xf32> to vector<48x128xf32>
    %63 = arith.mulf %60, %62 : vector<48x128xf32>
    %64 = arith.truncf %63 : vector<48x128xf32> to vector<48x128xbf16>
    %65 = tpu.concatenate %28, %33, %38, %43, %44, %49, %54, %59, %64 in 0 : vector<48x128xbf16>, vector<48x128xbf16>, vector<48x128xbf16>, vector<48x128xbf16>, vector<48x128xbf16>, vector<48x128xbf16>, vector<48x128xbf16>, vector<48x128xbf16>, vector<48x128xbf16> -> vector<432x128xbf16>
    %c0_21 = arith.constant 0 : index
    %c0_22 = arith.constant 0 : index
    %66 = vector.load %arg3[%c0_21, %c0_22] : memref<16x432xbf16, #tpu.memory_space<vmem>>, vector<16x432xbf16>
    %cst_23 = arith.constant dense<0.000000e+00> : vector<16x128xf32>
    %67 = tpu.matmul %66, %65, %cst_23 {dimension_numbers = #tpu.dot_dimension_numbers<[1], [0], [0], [1], [0, 0, 1, 1], [], []>} : vector<16x432xbf16>, vector<432x128xbf16>, vector<16x128xf32> -> vector<16x128xf32>
    %68 = vector.extract_strided_slice %67 {offsets = [0, 0], sizes = [4, 128], strides = [1, 1]} : vector<16x128xf32> to vector<4x128xf32>
    %69 = vector.extract_strided_slice %67 {offsets = [4, 0], sizes = [4, 128], strides = [1, 1]} : vector<16x128xf32> to vector<4x128xf32>
    %70 = arith.addf %68, %69 : vector<4x128xf32>
    %71 = vector.extract_strided_slice %67 {offsets = [8, 0], sizes = [4, 128], strides = [1, 1]} : vector<16x128xf32> to vector<4x128xf32>
    %72 = arith.addf %70, %71 : vector<4x128xf32>
    %73 = vector.extract_strided_slice %67 {offsets = [12, 0], sizes = [4, 128], strides = [1, 1]} : vector<16x128xf32> to vector<4x128xf32>
    %74 = arith.addf %72, %73 : vector<4x128xf32>
    %cst_24 = arith.constant dense<0.000000e+00> : vector<4xf32>
    %75 = vector.multi_reduction <add>, %74, %cst_24 [1] : vector<4x128xf32> to vector<4xf32>
    %76 = vector.shape_cast %75 : vector<4xf32> to vector<4x1xf32>
    %cst_25 = arith.constant 0.001953125 : f32
    %77 = vector.broadcast %cst_25 : f32 to vector<4x1xf32>
    %78 = arith.mulf %76, %77 : vector<4x1xf32>
    %79 = tpu.concatenate %78, %78, %78, %78 in 0 : vector<4x1xf32>, vector<4x1xf32>, vector<4x1xf32>, vector<4x1xf32> -> vector<16x1xf32>
    %80 = vector.broadcast %79 : vector<16x1xf32> to vector<16x128xf32>
    %81 = arith.subf %67, %80 : vector<16x128xf32>
    %82 = arith.mulf %81, %81 : vector<16x128xf32>
    %83 = vector.extract_strided_slice %82 {offsets = [0, 0], sizes = [4, 128], strides = [1, 1]} : vector<16x128xf32> to vector<4x128xf32>
    %84 = vector.extract_strided_slice %82 {offsets = [4, 0], sizes = [4, 128], strides = [1, 1]} : vector<16x128xf32> to vector<4x128xf32>
    %85 = arith.addf %83, %84 : vector<4x128xf32>
    %86 = vector.extract_strided_slice %82 {offsets = [8, 0], sizes = [4, 128], strides = [1, 1]} : vector<16x128xf32> to vector<4x128xf32>
    %87 = arith.addf %85, %86 : vector<4x128xf32>
    %88 = vector.extract_strided_slice %82 {offsets = [12, 0], sizes = [4, 128], strides = [1, 1]} : vector<16x128xf32> to vector<4x128xf32>
    %89 = arith.addf %87, %88 : vector<4x128xf32>
    %cst_26 = arith.constant dense<0.000000e+00> : vector<4xf32>
    %90 = vector.multi_reduction <add>, %89, %cst_26 [1] : vector<4x128xf32> to vector<4xf32>
    %91 = vector.shape_cast %90 : vector<4xf32> to vector<4x1xf32>
    %cst_27 = arith.constant 0.001953125 : f32
    %92 = vector.broadcast %cst_27 : f32 to vector<4x1xf32>
    %93 = arith.mulf %91, %92 : vector<4x1xf32>
    %cst_28 = arith.constant 9.99999974E-6 : f32
    %94 = vector.broadcast %cst_28 : f32 to vector<4x1xf32>
    %95 = arith.addf %93, %94 : vector<4x1xf32>
    %96 = math.rsqrt %95 : vector<4x1xf32>
    %97 = tpu.concatenate %96, %96, %96, %96 in 0 : vector<4x1xf32>, vector<4x1xf32>, vector<4x1xf32>, vector<4x1xf32> -> vector<16x1xf32>
    %c0_29 = arith.constant 0 : index
    %c0_30 = arith.constant 0 : index
    %98 = vector.load %arg5[%c0_29, %c0_30] : memref<16x2xf32, #tpu.memory_space<vmem>>, vector<16x1xf32>
    %99 = arith.mulf %98, %97 : vector<16x1xf32>
    %100 = vector.broadcast %99 : vector<16x1xf32> to vector<16x128xf32>
    %101 = arith.mulf %81, %100 : vector<16x128xf32>
    %c0_31 = arith.constant 0 : index
    %c1_32 = arith.constant 1 : index
    %102 = vector.load %arg5[%c0_31, %c1_32] : memref<16x2xf32, #tpu.memory_space<vmem>>, vector<16x1xf32>
    %103 = vector.broadcast %102 : vector<16x1xf32> to vector<16x128xf32>
    %104 = arith.addf %101, %103 : vector<16x128xf32>
    %c0_33 = arith.constant 0 : index
    %c0_34 = arith.constant 0 : index
    %105 = vector.load %arg6[%c0_33, %c0_34] : memref<16x128xf32, #tpu.memory_space<vmem>>, vector<16x128xf32>
    tpu.vector_store %arg6[%c0_33, %c0_34], %104 {strides = array<i32>} : memref<16x128xf32, #tpu.memory_space<vmem>>, vector<16x128xf32>,
    return
  }
}

</mosaic_0001>

<llo_original>
// kernel: tile.13
$region0: #{tile.13}
  #allocation0 [shape = 's32[1]{0}', space=sflag, size = 0x4, scoped, tag = 'scoped memory for tile.13']
  %s0 = inlined_call_operand.vmem [shape: f32[4], index: 0, kind: input, shape index: {}]
  %s1 = inlined_call_operand.vmem [shape: f32[4,4], index: 1, kind: output, shape index: {}]
  // Predicated region
  $region2: #{tile.13} parent=0 // pred_check
    _
  $region3: #{tile.13} parent=0 // pred_check_branch
    %3 = sbr.rel (0) target = $region5
  $region4: #{tile.13} parent=0 // pred_region
    _
  $region5: #{tile.13} parent=0 // pred_fallthru
    _
  %v4 = vld [vmem:[%s0] ss:$0 sm:$0xff]
  %5 = vst [vmem:[%s1] sm:$0xf] %v4

// kernel: tile.18
$region0: #{tile.18}
  %s0 = inlined_call_operand.vmem [shape: f32[4,4], index: 0, kind: input, shape index: {}]
  %s1 = inlined_call_operand.vmem [shape: f32[16,1], index: 1, kind: output, shape index: {}]
  $region1: #{tile.18} parent=0
    #allocation0 [shape = 'u8[4096]{0}', space=vmem, size = 0x1000, scoped, tag = 'scoped mem for output reshape']
    #allocation1 [shape = 'u8[4096]{0}', space=vmem, size = 0x1000, scoped, tag = 'scoped mem for input reshape']
    %s3 = sshll.u32 1, 4
    %s4 = ssub.s32 %s3, 1
    %v5 = vld [vmem:[%s0] sm:%s4]
    %6 = vst [vmem:[#allocation1] sm:%s4] %v5
    %v7 = vld [vmem:[#allocation1] sm:$0x1]
    %vm8 = vcmask 31744
    %9 = vst.msk [vmem:[#allocation0] sm:$0x1] %vm8, %v7
    %s10 = scalar_lea.vmem [#allocation1], 3
    %v11 = vld [vmem:[%s10] sm:$0x1]
    %12 = vrot.lane.b32.xlu0 %v11, 12
    %v13 = vpop.permute.xlu0 %12
    %vm14 = vcmask 130144
    %15 = vst.msk [vmem:[#allocation0] sm:$0x1] %vm14, %v13
    %s16 = scalar_lea.vmem [#allocation1], 2
    %v17 = vld [vmem:[%s16] sm:$0x1]
    %18 = vrot.lane.b32.xlu0 %v17, 8
    %v19 = vpop.permute.xlu0 %18
    %vm20 = vcmask 97344
    %21 = vst.msk [vmem:[#allocation0] sm:$0x1] %vm20, %v19
    %s22 = scalar_lea.vmem [#allocation1], 1
    %v23 = vld [vmem:[%s22] sm:$0x1]
    %24 = vrot.lane.b32.xlu0 %v23, 4
    %v25 = vpop.permute.xlu0 %24
    %vm26 = vcmask 64544
    %27 = vst.msk [vmem:[#allocation0] sm:$0x1] %vm26, %v25
    %s29 = sshll.u32 1, 1
    %s30 = ssub.s32 %s29, 1
    %v32 = vld [vmem:[#allocation0] sm:%s30]
    %s33 = sshll.u32 1, 1
    %s34 = ssub.s32 %s33, 1
    %35 = vst [vmem:[%s1] sm:%s34] %v32

// kernel: testnet_forward.1
$region0: #{testnet_forward.1}
  #allocation0 [shape = 'u32[]', space=smem, size = 0x4, offset = 0x4, fixed_abs, tag = 'smem constant byte address 0x4 - core index']
  #allocation1 [shape = 'u32[144,128]{1,0:T(1,128)}', space=vmem, size = 0x12000, scoped, tag = 'internal scratch']
  %s0 = inlined_call_operand.vmem [shape: bf16[64,128], index: 0, kind: input, shape index: {}]
  %s1 = inlined_call_operand.vmem [shape: bf16[48,64], index: 1, kind: input, shape index: {}]
  %s2 = inlined_call_operand.vmem [shape: f32[48,2], index: 2, kind: input, shape index: {}]
  %s3 = inlined_call_operand.vmem [shape: bf16[16,432], index: 3, kind: input, shape index: {}]
  %s4 = inlined_call_operand.vmem [shape: f32[8,128], index: 4, kind: input, shape index: {}]
  %s5 = inlined_call_operand.vmem [shape: f32[16,2], index: 5, kind: input, shape index: {}]
  %s6 = inlined_call_operand.vmem [shape: f32[16,128], index: 6, kind: output, shape index: {}]
  %s7 = sld [smem:[#allocation0]]
  $region34: #{testnet_forward.1} parent=0
    _
  %s9 = ssub.s32 1, %s7
  %s10 = scalar_select 0, %s9, %s7
  // Predicated region
  $region2: #{testnet_forward.1} parent=0 // pred_check
    _
  $region3: #{testnet_forward.1} parent=0 // pred_check_branch
    %12 = sbr.rel (0) target = $region5
  $region4: #{testnet_forward.1} parent=0 // pred_region
    _
  $region5: #{testnet_forward.1} parent=0 // pred_fallthru
    _
  // Predicated region
  $region6: #{testnet_forward.1} parent=0 // pred_check
    _
  $region7: #{testnet_forward.1} parent=0 // pred_check_branch
    %14 = sbr.rel (0) target = $region9
  $region8: #{testnet_forward.1} parent=0 // pred_region
    _
  $region9: #{testnet_forward.1} parent=0 // pred_fallthru
    _
  // Predicated region
  $region10: #{testnet_forward.1} parent=0 // pred_check
    _
  $region11: #{testnet_forward.1} parent=0 // pred_check_branch
    %16 = sbr.rel (0) target = $region13
  $region12: #{testnet_forward.1} parent=0 // pred_region
    _
  $region13: #{testnet_forward.1} parent=0 // pred_fallthru
    _
  // Predicated region
  $region14: #{testnet_forward.1} parent=0 // pred_check
    _
  $region15: #{testnet_forward.1} parent=0 // pred_check_branch
    %18 = sbr.rel (0) target = $region17
  $region16: #{testnet_forward.1} parent=0 // pred_region
    _
  $region17: #{testnet_forward.1} parent=0 // pred_fallthru
    _
  // Predicated region
  $region18: #{testnet_forward.1} parent=0 // pred_check
    _
  $region19: #{testnet_forward.1} parent=0 // pred_check_branch
    %20 = sbr.rel (0) target = $region21
  $region20: #{testnet_forward.1} parent=0 // pred_region
    _
  $region21: #{testnet_forward.1} parent=0 // pred_fallthru
    _
  // Predicated region
  $region22: #{testnet_forward.1} parent=0 // pred_check
    _
  $region23: #{testnet_forward.1} parent=0 // pred_check_branch
    %22 = sbr.rel (0) target = $region25
  $region24: #{testnet_forward.1} parent=0 // pred_region
    _
  $region25: #{testnet_forward.1} parent=0 // pred_fallthru
    _
  %v24 = vld [vmem:[%s1] sm:$0xf]
  %v25 = vld [vmem:[%s1 + $0x4] sm:$0xf]
  %v26 = vld [vmem:[%s1 + $0x8] sm:$0xf]
  %v27 = vld [vmem:[%s1 + $0xc] sm:$0xf]
  %v28 = vld [vmem:[%s1 + $0x10] sm:$0xf]
  %v29 = vld [vmem:[%s1 + $0x14] sm:$0xf]
  %v30 = vld [vmem:[%s0] sm:$0xf]
  %v31 = vld [vmem:[%s0 + $0x4] sm:$0xf]
  %v32 = vld [vmem:[%s0 + $0x8] sm:$0xf]
  %v33 = vld [vmem:[%s0 + $0xc] sm:$0xf]
  %v34 = vld [vmem:[%s0 + $0x10] sm:$0xf]
  %v35 = vld [vmem:[%s0 + $0x14] sm:$0xf]
  %v36 = vld [vmem:[%s0 + $0x18] sm:$0xf]
  %v37 = vld [vmem:[%s0 + $0x1c] sm:$0xf]
  %v44 = vunpack.c.l.b16 %v24
  %v45 = vunpack.c.l.b16 %v25
  %v46 = vunpack.c.l.b16 %v26
  %v47 = vunpack.c.l.b16 %v27
  %v48 = vunpack.c.l.b16 %v28
  %v49 = vunpack.c.l.b16 %v29
  %v50 = vpack.c.b16 %v45, %v44
  %v51 = vpack.c.b16 %v47, %v46
  %v52 = vpack.c.b16 %v49, %v48
  %v61 = vunpack.c.l.b16 %v30
  %v62 = vunpack.c.l.b16 %v31
  %v63 = vunpack.c.l.b16 %v32
  %v64 = vunpack.c.l.b16 %v33
  %v65 = vunpack.c.l.b16 %v34
  %v66 = vunpack.c.l.b16 %v35
  %v67 = vunpack.c.l.b16 %v36
  %v68 = vunpack.c.l.b16 %v37
  %v69 = vpack.c.b16 %v62, %v61
  %v70 = vpack.c.b16 %v64, %v63
  %v71 = vpack.c.b16 %v66, %v65
  %v72 = vpack.c.b16 %v68, %v67
  %vm77 = vcmask 523264
  %v79 = vsel %vm77, %v50, 0
  %v82 = vsel %vm77, %v51, 0
  %v85 = vsel %vm77, %v52, 0
  %87 = vmatprep.subr.bf16.mxu0 0
  %88 = vmatpush1.bf16.msra.mxu0 0
  %89 = vmatprep.subr.bf16.mxu0 0
  %90 = vmatpush1.bf16.msra.mxu0 0
  %91 = vmatprep.subr.bf16.mxu0 0
  %92 = vmatpush1.bf16.msra.mxu0 0
  %93 = vmatprep.subr.bf16.mxu0 0
  %94 = vmatpush1.bf16.msra.mxu0 0
  %95 = vmatprep.subr.bf16.mxu0 0
  %96 = vmatpush1.bf16.msra.mxu0 %v72
  %97 = vmatprep.subr.bf16.mxu0 0
  %98 = vmatpush1.bf16.msra.mxu0 %v71
  %99 = vmatprep.subr.bf16.mxu0 0
  %100 = vmatpush1.bf16.msra.mxu0 %v70
  %101 = vmatprep.subr.bf16.mxu0 0
  %102 = vmatpush1.bf16.msra.mxu0 %v69
  %103 = vmatprep.subr.bf16.mxu0 0
  %104 = vmatpush2.bf16.msra.mxu0 0
  %105 = vmatprep.subr.bf16.mxu0 0
  %106 = vmatpush2.bf16.msra.mxu0 0
  %107 = vmatprep.subr.bf16.mxu0 0
  %108 = vmatpush2.bf16.msra.mxu0 0
  %109 = vmatprep.subr.bf16.mxu0 0
  %110 = vmatpush2.bf16.msra.mxu0 0
  %111 = vmatprep.subr.bf16.mxu0 0
  %112 = vmatpush2.bf16.msra.mxu0 0
  %113 = vmatprep.subr.bf16.mxu0 0
  %114 = vmatpush2.bf16.msra.mxu0 0
  %115 = vmatprep.subr.bf16.mxu0 0
  %116 = vmatpush2.bf16.msra.mxu0 0
  %117 = vmatprep.subr.bf16.mxu0 0
  %118 = vmatpush2.bf16.msra.mxu0 0
  %119 = vmatprep.mubr.bf16.mxu0 0
  %120 = vmatmul.mubr.bf16.gmra.mxu0 %v79
  %v121 = vpop.f32.mrf.mxu0
  %v122 = vadd.f32 0.0, %v121
  %v123 = vpop.f32.mrf.mxu0
  %v124 = vpop.f32.mrf.mxu0
  %v125 = vadd.f32 0.0, %v124
  %v126 = vpop.f32.mrf.mxu0
  %127 = vmatprep.mubr.bf16.mxu0 0
  %128 = vmatmul.mubr.bf16.gmra.mxu0 %v82
  %v129 = vpop.f32.mrf.mxu0
  %v130 = vadd.f32 0.0, %v129
  %v131 = vpop.f32.mrf.mxu0
  %v132 = vpop.f32.mrf.mxu0
  %v133 = vadd.f32 0.0, %v132
  %v134 = vpop.f32.mrf.mxu0
  %135 = vmatprep.mubr.bf16.mxu0 0
  %136 = vmatmul.mubr.bf16.gmra.mxu0 %v85
  %v137 = vpop.f32.mrf.mxu0
  %v138 = vadd.f32 0.0, %v137
  %v139 = vpop.f32.mrf.mxu0
  %v140 = vpop.f32.mrf.mxu0
  %v141 = vadd.f32 0.0, %v140
  %v142 = vpop.f32.mrf.mxu0
  %143 = vdwg.mxu0
  %144 = vadd.xlane.f32.xlu0 %v122
  %v145 = vpop.xlane.xlu0 %144
  %146 = vadd.xlane.f32.xlu0 %v125
  %v147 = vpop.xlane.xlu0 %146
  %148 = vadd.xlane.f32.xlu0 %v130
  %v149 = vpop.xlane.xlu0 %148
  %150 = vadd.xlane.f32.xlu0 %v133
  %v151 = vpop.xlane.xlu0 %150
  %152 = vadd.xlane.f32.xlu0 %v138
  %v153 = vpop.xlane.xlu0 %152
  %154 = vadd.xlane.f32.xlu0 %v141
  %v155 = vpop.xlane.xlu0 %154
  %v156 = vmul.f32 %v145, 0.0078125
  %v157 = vmul.f32 %v147, 0.0078125
  %v158 = vmul.f32 %v149, 0.0078125
  %v159 = vmul.f32 %v151, 0.0078125
  %v160 = vmul.f32 %v153, 0.0078125
  %v161 = vmul.f32 %v155, 0.0078125
  %v162 = vsub.f32 %v122, %v156
  %v163 = vsub.f32 %v125, %v157
  %v164 = vsub.f32 %v130, %v158
  %v165 = vsub.f32 %v133, %v159
  %v166 = vsub.f32 %v138, %v160
  %v167 = vsub.f32 %v141, %v161
  %v168 = vmul.f32 %v162, %v162
  %v169 = vmul.f32 %v163, %v163
  %v170 = vmul.f32 %v164, %v164
  %v171 = vmul.f32 %v165, %v165
  %v172 = vmul.f32 %v166, %v166
  %v173 = vmul.f32 %v167, %v167
  %174 = vadd.xlane.f32.xlu0 %v168
  %v175 = vpop.xlane.xlu0 %174
  %176 = vadd.xlane.f32.xlu0 %v169
  %v177 = vpop.xlane.xlu0 %176
  %178 = vadd.xlane.f32.xlu0 %v170
  %v179 = vpop.xlane.xlu0 %178
  %180 = vadd.xlane.f32.xlu0 %v171
  %v181 = vpop.xlane.xlu0 %180
  %182 = vadd.xlane.f32.xlu0 %v172
  %v183 = vpop.xlane.xlu0 %182
  %184 = vadd.xlane.f32.xlu0 %v173
  %v185 = vpop.xlane.xlu0 %184
  %v186 = vmul.f32 %v175, 0.0078125
  %v187 = vmul.f32 %v177, 0.0078125
  %v188 = vmul.f32 %v179, 0.0078125
  %v189 = vmul.f32 %v181, 0.0078125
  %v190 = vmul.f32 %v183, 0.0078125
  %v191 = vmul.f32 %v185, 0.0078125
  %v192 = vld [vmem:[%s2] sm:$0xff]
  %v193 = vld [vmem:[%s2 + $0x8] sm:$0xff]
  %v194 = vld [vmem:[%s2 + $0x10] sm:$0xff]
  %v195 = vld [vmem:[%s2 + $0x18] sm:$0xff]
  %v196 = vld [vmem:[%s2 + $0x20] sm:$0xff]
  %v197 = vld [vmem:[%s2 + $0x28] sm:$0xff]
  %v198 = vadd.f32 %v186, 1e-05
  %v199 = vadd.f32 %v187, 1e-05
  %v200 = vadd.f32 %v188, 1e-05
  %v201 = vadd.f32 %v189, 1e-05
  %v202 = vadd.f32 %v190, 1e-05
  %v203 = vadd.f32 %v191, 1e-05
  %v204 = vrsqrt.pop %v198
  %v205 = vrsqrt.pop %v199
  %v206 = vrsqrt.pop %v200
  %v207 = vrsqrt.pop %v201
  %v208 = vrsqrt.pop %v202
  %v209 = vrsqrt.pop %v203
  %v210 = vmul.f32 %v192, %v204
  %v211 = vmul.f32 %v193, %v205
  %v212 = vmul.f32 %v194, %v206
  %v213 = vmul.f32 %v195, %v207
  %v214 = vmul.f32 %v196, %v208
  %v215 = vmul.f32 %v197, %v209
  %217 = vset.pattern.permute.xlu0 0
  %218 = vperm.xlu0 %217, %v210
  %v219 = vpop.permute.xlu0 %218
  %222 = vset.pattern.permute.xlu0 0
  %223 = vperm.xlu0 %222, %v211
  %v224 = vpop.permute.xlu0 %223
  %227 = vset.pattern.permute.xlu0 0
  %228 = vperm.xlu0 %227, %v212
  %v229 = vpop.permute.xlu0 %228
  %232 = vset.pattern.permute.xlu0 0
  %233 = vperm.xlu0 %232, %v213
  %v234 = vpop.permute.xlu0 %233
  %237 = vset.pattern.permute.xlu0 0
  %238 = vperm.xlu0 %237, %v214
  %v239 = vpop.permute.xlu0 %238
  %242 = vset.pattern.permute.xlu0 0
  %243 = vperm.xlu0 %242, %v215
  %v244 = vpop.permute.xlu0 %243
  %v246 = vmul.f32 %v162, %v219
  %v247 = vmul.f32 %v163, %v224
  %v248 = vmul.f32 %v164, %v229
  %v249 = vmul.f32 %v165, %v234
  %v250 = vmul.f32 %v166, %v239
  %v251 = vmul.f32 %v167, %v244
  %253 = vset.pattern.permute.xlu0 1
  %254 = vperm.xlu0 %253, %v192
  %v255 = vpop.permute.xlu0 %254
  %258 = vset.pattern.permute.xlu0 1
  %259 = vperm.xlu0 %258, %v193
  %v260 = vpop.permute.xlu0 %259
  %263 = vset.pattern.permute.xlu0 1
  %264 = vperm.xlu0 %263, %v194
  %v265 = vpop.permute.xlu0 %264
  %268 = vset.pattern.permute.xlu0 1
  %269 = vperm.xlu0 %268, %v195
  %v270 = vpop.permute.xlu0 %269
  %273 = vset.pattern.permute.xlu0 1
  %274 = vperm.xlu0 %273, %v196
  %v275 = vpop.permute.xlu0 %274
  %278 = vset.pattern.permute.xlu0 1
  %279 = vperm.xlu0 %278, %v197
  %v280 = vpop.permute.xlu0 %279
  %v282 = vadd.f32 %v246, %v255
  %v283 = vadd.f32 %v247, %v260
  %v284 = vadd.f32 %v248, %v265
  %v285 = vadd.f32 %v249, %v270
  %v286 = vadd.f32 %v250, %v275
  %v287 = vadd.f32 %v251, %v280
  %288 = vrot.lane.b32.xlu0 %v282, 9
  %v289 = vpop.permute.xlu0 %288
  %290 = vrot.lane.b32.xlu0 %v283, 9
  %v291 = vpop.permute.xlu0 %290
  %292 = vrot.lane.b32.xlu0 %v284, 9
  %v293 = vpop.permute.xlu0 %292
  %294 = vrot.lane.b32.xlu0 %v285, 9
  %v295 = vpop.permute.xlu0 %294
  %296 = vrot.lane.b32.xlu0 %v286, 9
  %v297 = vpop.permute.xlu0 %296
  %298 = vrot.lane.b32.xlu0 %v287, 9
  %v299 = vpop.permute.xlu0 %298
  %v300 = vld [vmem:[%s4] sm:$0x1]
  %v301 = vlaneseq
  %v302 = vshrl.u32 %v301, 7
  %v303 = vsub.s32 0, %v302
  %v304 = vrot.slane %v300, %v303
  %v305 = vmul.f32 %v289, %v304
  %v306 = vmul.f32 %v291, %v304
  %v307 = vmul.f32 %v293, %v304
  %v308 = vmul.f32 %v295, %v304
  %v309 = vmul.f32 %v297, %v304
  %v310 = vmul.f32 %v299, %v304
  %v311 = vpack.c.bf16 %v306, %v305
  %v312 = vpack.c.bf16 %v308, %v307
  %v313 = vpack.c.bf16 %v310, %v309
  %314 = vrot.lane.b32.xlu0 %v282, 8
  %v315 = vpop.permute.xlu0 %314
  %316 = vrot.lane.b32.xlu0 %v283, 8
  %v317 = vpop.permute.xlu0 %316
  %318 = vrot.lane.b32.xlu0 %v284, 8
  %v319 = vpop.permute.xlu0 %318
  %320 = vrot.lane.b32.xlu0 %v285, 8
  %v321 = vpop.permute.xlu0 %320
  %322 = vrot.lane.b32.xlu0 %v286, 8
  %v323 = vpop.permute.xlu0 %322
  %324 = vrot.lane.b32.xlu0 %v287, 8
  %v325 = vpop.permute.xlu0 %324
  %v326 = vld [vmem:[%s4 + $0x1] sm:$0x1]
  %v327 = vlaneseq
  %v328 = vshrl.u32 %v327, 7
  %v329 = vsub.s32 0, %v328
  %v330 = vrot.slane %v326, %v329
  %v331 = vmul.f32 %v315, %v330
  %v332 = vmul.f32 %v317, %v330
  %v333 = vmul.f32 %v319, %v330
  %v334 = vmul.f32 %v321, %v330
  %v335 = vmul.f32 %v323, %v330
  %v336 = vmul.f32 %v325, %v330
  %v337 = vpack.c.bf16 %v332, %v331
  %v338 = vpack.c.bf16 %v334, %v333
  %v339 = vpack.c.bf16 %v336, %v335
  %340 = vrot.lane.b32.xlu0 %v282, 7
  %v341 = vpop.permute.xlu0 %340
  %342 = vrot.lane.b32.xlu0 %v283, 7
  %v343 = vpop.permute.xlu0 %342
  %344 = vrot.lane.b32.xlu0 %v284, 7
  %v345 = vpop.permute.xlu0 %344
  %346 = vrot.lane.b32.xlu0 %v285, 7
  %v347 = vpop.permute.xlu0 %346
  %348 = vrot.lane.b32.xlu0 %v286, 7
  %v349 = vpop.permute.xlu0 %348
  %350 = vrot.lane.b32.xlu0 %v287, 7
  %v351 = vpop.permute.xlu0 %350
  %v352 = vld [vmem:[%s4 + $0x2] sm:$0x1]
  %v353 = vlaneseq
  %v354 = vshrl.u32 %v353, 7
  %v355 = vsub.s32 0, %v354
  %v356 = vrot.slane %v352, %v355
  %v357 = vmul.f32 %v341, %v356
  %v358 = vmul.f32 %v343, %v356
  %v359 = vmul.f32 %v345, %v356
  %v360 = vmul.f32 %v347, %v356
  %v361 = vmul.f32 %v349, %v356
  %v362 = vmul.f32 %v351, %v356
  %v363 = vpack.c.bf16 %v358, %v357
  %v364 = vpack.c.bf16 %v360, %v359
  %v365 = vpack.c.bf16 %v362, %v361
  %366 = vrot.lane.b32.xlu0 %v282, 1
  %v367 = vpop.permute.xlu0 %366
  %368 = vrot.lane.b32.xlu0 %v283, 1
  %v369 = vpop.permute.xlu0 %368
  %370 = vrot.lane.b32.xlu0 %v284, 1
  %v371 = vpop.permute.xlu0 %370
  %372 = vrot.lane.b32.xlu0 %v285, 1
  %v373 = vpop.permute.xlu0 %372
  %374 = vrot.lane.b32.xlu0 %v286, 1
  %v375 = vpop.permute.xlu0 %374
  %376 = vrot.lane.b32.xlu0 %v287, 1
  %v377 = vpop.permute.xlu0 %376
  %v378 = vld [vmem:[%s4 + $0x3] sm:$0x1]
  %v379 = vlaneseq
  %v380 = vshrl.u32 %v379, 7
  %v381 = vsub.s32 0, %v380
  %v382 = vrot.slane %v378, %v381
  %v383 = vmul.f32 %v367, %v382
  %v384 = vmul.f32 %v369, %v382
  %v385 = vmul.f32 %v371, %v382
  %v386 = vmul.f32 %v373, %v382
  %v387 = vmul.f32 %v375, %v382
  %v388 = vmul.f32 %v377, %v382
  %v389 = vpack.c.bf16 %v384, %v383
  %v390 = vpack.c.bf16 %v386, %v385
  %v391 = vpack.c.bf16 %v388, %v387
  %v392 = vpack.c.bf16 %v283, %v282
  %v393 = vpack.c.bf16 %v285, %v284
  %v394 = vpack.c.bf16 %v287, %v286
  %395 = vrot.lane.b32.xlu0 %v282, 127
  %v396 = vpop.permute.xlu0 %395
  %397 = vrot.lane.b32.xlu0 %v283, 127
  %v398 = vpop.permute.xlu0 %397
  %399 = vrot.lane.b32.xlu0 %v284, 127
  %v400 = vpop.permute.xlu0 %399
  %401 = vrot.lane.b32.xlu0 %v285, 127
  %v402 = vpop.permute.xlu0 %401
  %403 = vrot.lane.b32.xlu0 %v286, 127
  %v404 = vpop.permute.xlu0 %403
  %405 = vrot.lane.b32.xlu0 %v287, 127
  %v406 = vpop.permute.xlu0 %405
  %v407 = vld [vmem:[%s4 + $0x4] sm:$0x1]
  %v408 = vlaneseq
  %v409 = vshrl.u32 %v408, 7
  %v410 = vsub.s32 0, %v409
  %v411 = vrot.slane %v407, %v410
  %v412 = vmul.f32 %v396, %v411
  %v413 = vmul.f32 %v398, %v411
  %v414 = vmul.f32 %v400, %v411
  %v415 = vmul.f32 %v402, %v411
  %v416 = vmul.f32 %v404, %v411
  %v417 = vmul.f32 %v406, %v411
  %v418 = vpack.c.bf16 %v413, %v412
  %v419 = vpack.c.bf16 %v415, %v414
  %v420 = vpack.c.bf16 %v417, %v416
  %421 = vrot.lane.b32.xlu0 %v282, 121
  %v422 = vpop.permute.xlu0 %421
  %423 = vrot.lane.b32.xlu0 %v283, 121
  %v424 = vpop.permute.xlu0 %423
  %425 = vrot.lane.b32.xlu0 %v284, 121
  %v426 = vpop.permute.xlu0 %425
  %427 = vrot.lane.b32.xlu0 %v285, 121
  %v428 = vpop.permute.xlu0 %427
  %429 = vrot.lane.b32.xlu0 %v286, 121
  %v430 = vpop.permute.xlu0 %429
  %431 = vrot.lane.b32.xlu0 %v287, 121
  %v432 = vpop.permute.xlu0 %431
  %v433 = vld [vmem:[%s4 + $0x5] sm:$0x1]
  %v434 = vlaneseq
  %v435 = vshrl.u32 %v434, 7
  %v436 = vsub.s32 0, %v435
  %v437 = vrot.slane %v433, %v436
  %v438 = vmul.f32 %v422, %v437
  %v439 = vmul.f32 %v424, %v437
  %v440 = vmul.f32 %v426, %v437
  %v441 = vmul.f32 %v428, %v437
  %v442 = vmul.f32 %v430, %v437
  %v443 = vmul.f32 %v432, %v437
  %v444 = vpack.c.bf16 %v439, %v438
  %v445 = vpack.c.bf16 %v441, %v440
  %v446 = vpack.c.bf16 %v443, %v442
  %447 = vrot.lane.b32.xlu0 %v282, 120
  %v448 = vpop.permute.xlu0 %447
  %449 = vrot.lane.b32.xlu0 %v283, 120
  %v450 = vpop.permute.xlu0 %449
  %451 = vrot.lane.b32.xlu0 %v284, 120
  %v452 = vpop.permute.xlu0 %451
  %453 = vrot.lane.b32.xlu0 %v285, 120
  %v454 = vpop.permute.xlu0 %453
  %455 = vrot.lane.b32.xlu0 %v286, 120
  %v456 = vpop.permute.xlu0 %455
  %457 = vrot.lane.b32.xlu0 %v287, 120
  %v458 = vpop.permute.xlu0 %457
  %v459 = vld [vmem:[%s4 + $0x6] sm:$0x1]
  %v460 = vlaneseq
  %v461 = vshrl.u32 %v460, 7
  %v462 = vsub.s32 0, %v461
  %v463 = vrot.slane %v459, %v462
  %v464 = vmul.f32 %v448, %v463
  %v465 = vmul.f32 %v450, %v463
  %v466 = vmul.f32 %v452, %v463
  %v467 = vmul.f32 %v454, %v463
  %v468 = vmul.f32 %v456, %v463
  %v469 = vmul.f32 %v458, %v463
  %v470 = vpack.c.bf16 %v465, %v464
  %v471 = vpack.c.bf16 %v467, %v466
  %v472 = vpack.c.bf16 %v469, %v468
  %473 = vrot.lane.b32.xlu0 %v282, 119
  %v474 = vpop.permute.xlu0 %473
  %475 = vrot.lane.b32.xlu0 %v283, 119
  %v476 = vpop.permute.xlu0 %475
  %477 = vrot.lane.b32.xlu0 %v284, 119
  %v478 = vpop.permute.xlu0 %477
  %479 = vrot.lane.b32.xlu0 %v285, 119
  %v480 = vpop.permute.xlu0 %479
  %481 = vrot.lane.b32.xlu0 %v286, 119
  %v482 = vpop.permute.xlu0 %481
  %483 = vrot.lane.b32.xlu0 %v287, 119
  %v484 = vpop.permute.xlu0 %483
  %v485 = vld [vmem:[%s4 + $0x7] sm:$0x1]
  %v486 = vlaneseq
  %v487 = vshrl.u32 %v486, 7
  %v488 = vsub.s32 0, %v487
  %v489 = vrot.slane %v485, %v488
  %v490 = vmul.f32 %v474, %v489
  %v491 = vmul.f32 %v476, %v489
  %v492 = vmul.f32 %v478, %v489
  %v493 = vmul.f32 %v480, %v489
  %v494 = vmul.f32 %v482, %v489
  %v495 = vmul.f32 %v484, %v489
  %v496 = vpack.c.bf16 %v491, %v490
  %v497 = vpack.c.bf16 %v493, %v492
  %v498 = vpack.c.bf16 %v495, %v494
  %v499 = vld [vmem:[%s3] sm:$0xff]
  %v500 = vld [vmem:[%s3 + $0x8] sm:$0xff]
  %v501 = vld [vmem:[%s3 + $0x10] sm:$0xff]
  %v502 = vld [vmem:[%s3 + $0x18] sm:$0xff]
  %v507 = vunpack.c.l.b16 %v499
  %v508 = vunpack.c.h.b16 %v499
  %v509 = vunpack.c.l.b16 %v500
  %v510 = vunpack.c.h.b16 %v500
  %v511 = vunpack.c.l.b16 %v501
  %v512 = vunpack.c.h.b16 %v501
  %v513 = vunpack.c.l.b16 %v502
  %v514 = vunpack.c.h.b16 %v502
  %v515 = vpack.c.b16 %v511, %v507
  %v516 = vpack.c.b16 %v512, %v508
  %v517 = vpack.c.b16 %v513, %v509
  %v518 = vpack.c.b16 %v514, %v510
  %vm522 = vcmask 392192
  %v524 = vsel %vm522, %v518, 0
  %526 = vmatprep.subr.bf16.mxu0 0
  %527 = vmatpush1.bf16.msra.mxu0 %v364
  %528 = vmatprep.subr.bf16.mxu0 0
  %529 = vmatpush1.bf16.msra.mxu0 %v363
  %530 = vmatprep.subr.bf16.mxu0 0
  %531 = vmatpush1.bf16.msra.mxu0 %v339
  %532 = vmatprep.subr.bf16.mxu0 0
  %533 = vmatpush1.bf16.msra.mxu0 %v338
  %534 = vmatprep.subr.bf16.mxu0 0
  %535 = vmatpush1.bf16.msra.mxu0 %v337
  %536 = vmatprep.subr.bf16.mxu0 0
  %537 = vmatpush1.bf16.msra.mxu0 %v313
  %538 = vmatprep.subr.bf16.mxu0 0
  %539 = vmatpush1.bf16.msra.mxu0 %v312
  %540 = vmatprep.subr.bf16.mxu0 0
  %541 = vmatpush1.bf16.msra.mxu0 %v311
  %542 = vmatprep.subr.bf16.mxu0 0
  %543 = vmatpush2.bf16.msra.mxu0 %v418
  %544 = vmatprep.subr.bf16.mxu0 0
  %545 = vmatpush2.bf16.msra.mxu0 %v394
  %546 = vmatprep.subr.bf16.mxu0 0
  %547 = vmatpush2.bf16.msra.mxu0 %v393
  %548 = vmatprep.subr.bf16.mxu0 0
  %549 = vmatpush2.bf16.msra.mxu0 %v392
  %550 = vmatprep.subr.bf16.mxu0 0
  %551 = vmatpush2.bf16.msra.mxu0 %v391
  %552 = vmatprep.subr.bf16.mxu0 0
  %553 = vmatpush2.bf16.msra.mxu0 %v390
  %554 = vmatprep.subr.bf16.mxu0 0
  %555 = vmatpush2.bf16.msra.mxu0 %v389
  %556 = vmatprep.subr.bf16.mxu0 0
  %557 = vmatpush2.bf16.msra.mxu0 %v365
  %558 = vmatprep.mubr.bf16.mxu0 %v516
  %559 = vmatmul.mubr.bf16.gmra.mxu0 %v515
  %v560 = vpop.f32.mrf.mxu0
  %v561 = vadd.f32 0.0, %v560
  %v562 = vpop.f32.mrf.mxu0
  %v563 = vpop.f32.mrf.mxu0
  %v564 = vadd.f32 0.0, %v563
  %v565 = vpop.f32.mrf.mxu0
  %566 = vdwg.mxu0
  %567 = vmatprep.subr.bf16.mxu0 0
  %568 = vmatpush1.bf16.msra.mxu0 %v472
  %569 = vmatprep.subr.bf16.mxu0 0
  %570 = vmatpush1.bf16.msra.mxu0 %v471
  %571 = vmatprep.subr.bf16.mxu0 0
  %572 = vmatpush1.bf16.msra.mxu0 %v470
  %573 = vmatprep.subr.bf16.mxu0 0
  %574 = vmatpush1.bf16.msra.mxu0 %v446
  %575 = vmatprep.subr.bf16.mxu0 0
  %576 = vmatpush1.bf16.msra.mxu0 %v445
  %577 = vmatprep.subr.bf16.mxu0 0
  %578 = vmatpush1.bf16.msra.mxu0 %v444
  %579 = vmatprep.subr.bf16.mxu0 0
  %580 = vmatpush1.bf16.msra.mxu0 %v420
  %581 = vmatprep.subr.bf16.mxu0 0
  %582 = vmatpush1.bf16.msra.mxu0 %v419
  %583 = vmatprep.subr.bf16.mxu0 0
  %584 = vmatpush2.bf16.msra.mxu0 0
  %585 = vmatprep.subr.bf16.mxu0 0
  %586 = vmatpush2.bf16.msra.mxu0 0
  %587 = vmatprep.subr.bf16.mxu0 0
  %588 = vmatpush2.bf16.msra.mxu0 0
  %589 = vmatprep.subr.bf16.mxu0 0
  %590 = vmatpush2.bf16.msra.mxu0 0
  %591 = vmatprep.subr.bf16.mxu0 0
  %592 = vmatpush2.bf16.msra.mxu0 0
  %593 = vmatprep.subr.bf16.mxu0 0
  %594 = vmatpush2.bf16.msra.mxu0 %v498
  %595 = vmatprep.subr.bf16.mxu0 0
  %596 = vmatpush2.bf16.msra.mxu0 %v497
  %597 = vmatprep.subr.bf16.mxu0 0
  %598 = vmatpush2.bf16.msra.mxu0 %v496
  %599 = vmatprep.mubr.bf16.mxu0 %v524
  %600 = vmatmul.mubr.bf16.gmra.mxu0 %v517
  %v601 = vpop.f32.mrf.mxu0
  %v602 = vadd.f32 %v561, %v601
  %v603 = vpop.f32.mrf.mxu0
  %v604 = vpop.f32.mrf.mxu0
  %v605 = vadd.f32 %v564, %v604
  %v606 = vpop.f32.mrf.mxu0
  %607 = vdwg.mxu0
  %v609 = vrot.slane %v602, 4
  %v611 = vadd.f32 %v602, %v609
  %v612 = vadd.f32 %v611, %v605
  %v614 = vrot.slane %v605, 4
  %v616 = vadd.f32 %v612, %v614
  %vm617 = vcmask 1043456
  %v618 = vsel %vm617, %v616, 0.0
  %619 = vadd.xlane.f32.xlu0 %v618
  %v620 = vpop.xlane.xlu0 %619
  %v621 = vmul.f32 %v620, 0.001953125
  %v623 = vrot.slane %v621, 4
  %v625 = vsel %vm617, %v621, %v623
  %627 = vset.pattern.permute.xlu0 0
  %628 = vperm.xlu0 %627, %v625
  %v629 = vpop.permute.xlu0 %628
  %v631 = vsub.f32 %v602, %v629
  %v632 = vsub.f32 %v605, %v629
  %v633 = vmul.f32 %v631, %v631
  %v634 = vmul.f32 %v632, %v632
  %v636 = vrot.slane %v633, 4
  %v638 = vadd.f32 %v633, %v636
  %v639 = vadd.f32 %v638, %v634
  %v641 = vrot.slane %v634, 4
  %v643 = vadd.f32 %v639, %v641
  %v644 = vsel %vm617, %v643, 0.0
  %645 = vadd.xlane.f32.xlu0 %v644
  %v646 = vpop.xlane.xlu0 %645
  %v647 = vmul.f32 %v646, 0.001953125
  %v648 = vadd.f32 %v647, 1e-05
  %v649 = vrsqrt.pop %v648
  %v651 = vrot.slane %v649, 4
  %v653 = vsel %vm617, %v649, %v651
  %v654 = vld [vmem:[%s5] sm:$0xff]
  %v655 = vld [vmem:[%s5 + $0x8] sm:$0xff]
  %v656 = vmul.f32 %v654, %v653
  %v657 = vmul.f32 %v655, %v653
  %659 = vset.pattern.permute.xlu0 0
  %660 = vperm.xlu0 %659, %v656
  %v661 = vpop.permute.xlu0 %660
  %664 = vset.pattern.permute.xlu0 0
  %665 = vperm.xlu0 %664, %v657
  %v666 = vpop.permute.xlu0 %665
  %v668 = vmul.f32 %v631, %v661
  %v669 = vmul.f32 %v632, %v666
  %671 = vset.pattern.permute.xlu0 1
  %672 = vperm.xlu0 %671, %v654
  %v673 = vpop.permute.xlu0 %672
  %676 = vset.pattern.permute.xlu0 1
  %677 = vperm.xlu0 %676, %v655
  %v678 = vpop.permute.xlu0 %677
  %v680 = vadd.f32 %v668, %v673
  %v681 = vadd.f32 %v669, %v678
  %682 = vst [vmem:[%s6] sm:$0xff] %v680
  %683 = vst [vmem:[%s6 + $0x8] sm:$0xff] %v681
  // Predicated region
  $region26: #{testnet_forward.1} parent=0 // pred_check
    _
  $region27: #{testnet_forward.1} parent=0 // pred_check_branch
    %685 = sbr.rel (0) target = $region29
  $region28: #{testnet_forward.1} parent=0 // pred_region
    _
  $region29: #{testnet_forward.1} parent=0 // pred_fallthru
    _
  // Predicated region
  $region30: #{testnet_forward.1} parent=0 // pred_check
    _
  $region31: #{testnet_forward.1} parent=0 // pred_check_branch
    %687 = sbr.rel (0) target = $region33
  $region32: #{testnet_forward.1} parent=0 // pred_region
    _
  $region33: #{testnet_forward.1} parent=0 // pred_fallthru
    _

</llo_original>
